<compile_context>
chip_gen: v7x
topology: tpu7x:2x2x1
jax: 0.10.0
libtpu: 0.0.40
codegen_flags: <defaults>
</compile_context>

<pallas_src>
import functools
import math

import jax
import jax.numpy as jnp
from jax.experimental import pallas as pl
from jax.experimental.pallas import tpu as pltpu


def _round_up(n: int, m: int) -> int:
    return ((n + m - 1) // m) * m


def dqn_kernel(x_ref, w1_ref, b1_ref, w2_ref, b2_ref, out_ref):
    # One batch tile per grid step; weights/biases are fully VMEM-resident
    # (constant index maps), biases are always f32, accumulation is f32.
    x = x_ref[...].astype(jnp.float32)          # matches PyTorch x.float()
    x = x.astype(w1_ref.dtype)                  # no-op for f32; bf16 MXU path if enabled
    # Layer 1: Linear(obs -> hidden) + ReLU  (MXU matmul, f32 accumulate)
    h = jnp.dot(x, w1_ref[...], preferred_element_type=jnp.float32) + b1_ref[...]
    h = jnp.maximum(h, 0.0)
    # Layer 2: Linear(hidden -> actions), lane-dense (128-padded) output
    y = jnp.dot(h.astype(w2_ref.dtype), w2_ref[...],
                preferred_element_type=jnp.float32) + b2_ref[...]
    out_ref[...] = y.astype(out_ref.dtype)


def prepare_dqn_params(w1, b1, w2, b2, *, compute_dtype=jnp.float32):
    """One-time parameter prep (pad hidden/action dims to 128, cast).

    w1: (obs, H)   b1: (1, H)   w2: (H, A)   b2: (1, A)
    Returns (w1p, b1p, w2p, b2p) ready to feed to dqn_forward.
    The obs (K) dim is intentionally left unpadded.
    """
    K, H = w1.shape
    H2, A = w2.shape
    assert H2 == H and b1.shape == (1, H) and b2.shape == (1, A)
    Hp = _round_up(H, 128)
    Ap = _round_up(A, 128)
    w1p = jnp.pad(w1.astype(jnp.float32), ((0, 0), (0, Hp - H))).astype(compute_dtype)
    b1p = jnp.pad(b1.astype(jnp.float32), ((0, 0), (0, Hp - H)))
    w2p = jnp.pad(w2.astype(jnp.float32), ((0, Hp - H), (0, Ap - A))).astype(compute_dtype)
    b2p = jnp.pad(b2.astype(jnp.float32), ((0, 0), (0, Ap - A)))
    return w1p, b1p, w2p, b2p


@functools.partial(jax.jit, static_argnames=("n_actions", "block_b"))
def dqn_forward(x, w1p, b1p, w2p, b2p, *, n_actions, block_b=1024):
    """DQN forward pass.  x: (B, obs) any real dtype.  Returns (B, n_actions) f32."""
    B, K = x.shape
    Kw, Hp = w1p.shape
    Hp2, Ap = w2p.shape
    assert Kw == K and Hp2 == Hp
    assert b1p.shape == (1, Hp) and b2p.shape == (1, Ap)

    # Adaptive batch tile: sublane-aligned, large for big batches, but always
    # >= 2 grid steps once B >= 16 so v7x's two TensorCores both get work.
    block_b = max(8, _round_up(block_b, 8))
    B8 = _round_up(B, 8)
    if B8 >= 16:
        B_blk = min(block_b, _round_up(pl.cdiv(B8, 2), 8))
    else:
        B_blk = B8
    B_pad = _round_up(B8, B_blk)
    grid = (B_pad // B_blk,)

    # Only the batch dim is padded (fuses into the jitted program); padded
    # rows are zeros and are sliced off below.
    x_p = jnp.pad(x, ((0, B_pad - B), (0, 0))) if B_pad != B else x

    out_padded = pl.pallas_call(
        dqn_kernel,
        out_shape=jax.ShapeDtypeStruct((B_pad, Ap), jnp.float32),
        grid=grid,
        in_specs=[
            # Activation stream: one batch tile per grid step (auto double-buffered).
            # Last dim = full (unpadded) obs size -> legal full-extent block dim.
            pl.BlockSpec((B_blk, K), lambda i: (i, 0)),
            # Weights / biases: constant index maps -> stay VMEM-resident.
            pl.BlockSpec((K, Hp), lambda i: (0, 0)),
            pl.BlockSpec((1, Hp), lambda i: (0, 0)),
            pl.BlockSpec((Hp, Ap), lambda i: (0, 0)),
            pl.BlockSpec((1, Ap), lambda i: (0, 0)),
        ],
        out_specs=pl.BlockSpec((B_blk, Ap), lambda i: (i, 0)),
        compiler_params=pltpu.CompilerParams(
            dimension_semantics=("parallel",),
        ),
    )(x_p, w1p, b1p, w2p, b2p)

    # Strip batch / action padding (fused into the same jitted program).
    return out_padded[:B, :n_actions]


def init_dqn_params(key, obs_size, n_actions, hidden_size=128):
    """Deterministic PyTorch-style (uniform +-1/sqrt(fan_in)) init, (in, out) layout."""
    k1, k2, k3, k4 = jax.random.split(key, 4)
    bound1 = 1.0 / math.sqrt(obs_size)
    bound2 = 1.0 / math.sqrt(hidden_size)
    w1 = jax.random.uniform(k1, (obs_size, hidden_size), jnp.float32, -bound1, bound1)
    b1 = jax.random.uniform(k2, (1, hidden_size), jnp.float32, -bound1, bound1)
    w2 = jax.random.uniform(k3, (hidden_size, n_actions), jnp.float32, -bound2, bound2)
    b2 = jax.random.uniform(k4, (1, n_actions), jnp.float32, -bound2, bound2)
    return w1, b1, w2, b2


if __name__ == "__main__":
    obs_size, n_actions, hidden_size = 10, 5, 128
    batch = 32

    key = jax.random.PRNGKey(0)
    k_params, k_x = jax.random.split(key)
    w1, b1, w2, b2 = init_dqn_params(k_params, obs_size, n_actions, hidden_size)

    # One-time parameter prep (hoisted out of the per-call path).
    params = prepare_dqn_params(w1, b1, w2, b2)   # compute_dtype=jnp.bfloat16 for the MXU fast path

    x = jax.random.normal(k_x, (batch, obs_size), dtype=jnp.float32)

    out = jax.block_until_ready(dqn_forward(x, *params, n_actions=n_actions))

    # Pure-JAX reference of the forward-pass semantics (f32 throughout).
    ref = jnp.maximum(x.astype(jnp.float32) @ w1 + b1, 0.0) @ w2 + b2
    assert out.shape == (batch, n_actions), out.shape
    assert jnp.allclose(out, ref, atol=1e-5, rtol=1e-5)

    # Also exercise a ragged batch (batch-padding path).
    x2 = x[:5]
    out2 = jax.block_until_ready(dqn_forward(x2, *params, n_actions=n_actions))
    ref2 = jnp.maximum(x2 @ w1 + b1, 0.0) @ w2 + b2
    assert out2.shape == (5, n_actions)
    assert jnp.allclose(out2, ref2, atol=1e-5, rtol=1e-5)

    print("KERNEL_OK")
</pallas_src>

<mosaic_0001>
module attributes {stable_mosaic.version = 11 : i64} {
  func.func @dqn_kernel(%arg0: i32, %arg1: memref<16x10xf32, #tpu.memory_space<vmem>>, %arg2: memref<10x128xf32, #tpu.memory_space<vmem>>, %arg3: memref<1x128xf32, #tpu.memory_space<vmem>>, %arg4: memref<128x128xf32, #tpu.memory_space<vmem>>, %arg5: memref<1x128xf32, #tpu.memory_space<vmem>>, %arg6: memref<16x128xf32, #tpu.memory_space<vmem>>) attributes {dimension_semantics = [#tpu.dimension_semantics<parallel>], iteration_bounds = array<i64: 2>, scalar_prefetch = 0 : i64, scratch_operands = 0 : i64, tpu.core_type = #tpu.core_type<tc>, window_params = [{transform_indices = @transform_0, window_bounds = array<i64: 16, 10>}, {pipeline_mode = #tpu.pipeline_mode<synchronous>, transform_indices = @transform_1, window_bounds = array<i64: 10, 128>}, {pipeline_mode = #tpu.pipeline_mode<synchronous>, transform_indices = @transform_2, window_bounds = array<i64: 1, 128>}, {pipeline_mode = #tpu.pipeline_mode<synchronous>, transform_indices = @transform_3, window_bounds = array<i64: 128, 128>}, {pipeline_mode = #tpu.pipeline_mode<synchronous>, transform_indices = @transform_4, window_bounds = array<i64: 1, 128>}, {transform_indices = @transform_5, window_bounds = array<i64: 16, 128>}]} {
    %c0 = arith.constant 0 : index
    %c0_0 = arith.constant 0 : index
    %0 = vector.load %arg1[%c0, %c0_0] : memref<16x10xf32, #tpu.memory_space<vmem>>, vector<16x10xf32>
    %c0_1 = arith.constant 0 : index
    %c0_2 = arith.constant 0 : index
    %1 = vector.load %arg2[%c0_1, %c0_2] : memref<10x128xf32, #tpu.memory_space<vmem>>, vector<10x128xf32>
    %cst = arith.constant dense<0.000000e+00> : vector<16x128xf32>
    %2 = tpu.matmul %0, %1, %cst {dimension_numbers = #tpu.dot_dimension_numbers<[1], [0], [0], [1], [0, 0, 1, 1], [], []>} : vector<16x10xf32>, vector<10x128xf32>, vector<16x128xf32> -> vector<16x128xf32>
    %c0_3 = arith.constant 0 : index
    %c0_4 = arith.constant 0 : index
    %3 = vector.load %arg3[%c0_3, %c0_4] : memref<1x128xf32, #tpu.memory_space<vmem>>, vector<1x128xf32>
    %4 = vector.broadcast %3 : vector<1x128xf32> to vector<16x128xf32>
    %5 = arith.addf %2, %4 : vector<16x128xf32>
    %cst_5 = arith.constant 0.000000e+00 : f32
    %6 = vector.broadcast %cst_5 : f32 to vector<16x128xf32>
    %7 = arith.maximumf %5, %6 : vector<16x128xf32>
    %c0_6 = arith.constant 0 : index
    %c0_7 = arith.constant 0 : index
    %8 = vector.load %arg4[%c0_6, %c0_7] : memref<128x128xf32, #tpu.memory_space<vmem>>, vector<128x128xf32>
    %cst_8 = arith.constant dense<0.000000e+00> : vector<16x128xf32>
    %9 = tpu.matmul %7, %8, %cst_8 {dimension_numbers = #tpu.dot_dimension_numbers<[1], [0], [0], [1], [0, 0, 1, 1], [], []>} : vector<16x128xf32>, vector<128x128xf32>, vector<16x128xf32> -> vector<16x128xf32>
    %c0_9 = arith.constant 0 : index
    %c0_10 = arith.constant 0 : index
    %10 = vector.load %arg5[%c0_9, %c0_10] : memref<1x128xf32, #tpu.memory_space<vmem>>, vector<1x128xf32>
    %11 = vector.broadcast %10 : vector<1x128xf32> to vector<16x128xf32>
    %12 = arith.addf %9, %11 : vector<16x128xf32>
    %c0_11 = arith.constant 0 : index
    %c0_12 = arith.constant 0 : index
    %13 = vector.load %arg6[%c0_11, %c0_12] : memref<16x128xf32, #tpu.memory_space<vmem>>, vector<16x128xf32>
    tpu.vector_store %arg6[%c0_11, %c0_12], %12 {strides = array<i32>} : memref<16x128xf32, #tpu.memory_space<vmem>>, vector<16x128xf32>,
    return
  }
  func.func @transform_0(%arg0: i32) -> (i32, i32) {
    %c0_i32 = arith.constant 0 : i32
    %c0_i32_0 = arith.constant 0 : i32
    return %arg0, %c0_i32 : i32, i32
  }
  func.func @transform_1(%arg0: i32) -> (i32, i32) {
    %c0_i32 = arith.constant 0 : i32
    %c0_i32_0 = arith.constant 0 : i32
    %c0_i32_1 = arith.constant 0 : i32
    return %c0_i32, %c0_i32_0 : i32, i32
  }
  func.func @transform_2(%arg0: i32) -> (i32, i32) {
    %c0_i32 = arith.constant 0 : i32
    %c0_i32_0 = arith.constant 0 : i32
    %c0_i32_1 = arith.constant 0 : i32
    return %c0_i32, %c0_i32_0 : i32, i32
  }
  func.func @transform_3(%arg0: i32) -> (i32, i32) {
    %c0_i32 = arith.constant 0 : i32
    %c0_i32_0 = arith.constant 0 : i32
    %c0_i32_1 = arith.constant 0 : i32
    return %c0_i32, %c0_i32_0 : i32, i32
  }
  func.func @transform_4(%arg0: i32) -> (i32, i32) {
    %c0_i32 = arith.constant 0 : i32
    %c0_i32_0 = arith.constant 0 : i32
    %c0_i32_1 = arith.constant 0 : i32
    return %c0_i32, %c0_i32_0 : i32, i32
  }
  func.func @transform_5(%arg0: i32) -> (i32, i32) {
    %c0_i32 = arith.constant 0 : i32
    %c0_i32_0 = arith.constant 0 : i32
    return %arg0, %c0_i32 : i32, i32
  }
}

</mosaic_0001>

<llo_original>
// kernel: dqn_forward.1
$region0: #{dqn_forward.1}
  #allocation0 [shape = 'u32[]', space=smem, size = 0x4, offset = 0x4, fixed_abs, tag = 'smem constant byte address 0x4 - core index']
  #allocation1 [shape = 'u32[144,128]{1,0:T(1,128)}', space=vmem, size = 0x12000, scoped, tag = 'internal scratch']
  %s0 = inlined_call_operand.vmem [shape: f32[32,10], index: 0, kind: input, shape index: {}]
  %s1 = inlined_call_operand.vmem [shape: f32[10,128], index: 1, kind: input, shape index: {}]
  %s2 = inlined_call_operand.vmem [shape: f32[1,128], index: 2, kind: input, shape index: {}]
  %s3 = inlined_call_operand.hbm [shape: f32[128,128], index: 3, kind: input, shape index: {}]
  %s4 = inlined_call_operand.vmem [shape: f32[1,128], index: 4, kind: input, shape index: {}]
  %s5 = inlined_call_operand.vmem [shape: f32[32,128], index: 5, kind: output, shape index: {}]
  %s6 = sld [smem:[#allocation0]]
  $region57: #{dqn_forward.1} parent=0
    _
  %s8 = ssub.s32 1, %s6
  %s9 = scalar_select 0, %s8, %s6
  $region1: #{dqn_forward.1} parent=0
    #allocation2 [shape = 'u8[65536]{0}', space=vmem, size = 0x10000, scoped, tag = 'input window, operand 3, single buffered']
    #allocation3 [shape = 's32[2]{0}', space=sflag, size = 0x8, scoped, tag = 'scoped memory for dqn_forward.1']
    %10 = vsyncpa [#allocation3], 0
    loop: start=0, step=1, limit=4
    $region2: #{dqn_forward.1} parent=1 // loop_pre_header
      _
    $region3: #{dqn_forward.1} parent=1 // loop_header
      %s12 = sphi 0, %s16
      %p13 = scmp.ge.s32.totalorder %s12, 4
      %s22 = sphi 0, %s24
      %s25 = sphi 0, %s22
      %s26 = sphi 0, %s25
      %s42 = sphi 0, %s26
      %s46 = sphi 0, %s46
      %s48 = sphi 0, %s46
      %s49 = sphi 0, %s48
      %s63 = sphi 0, %s49
      %s67 = sphi 0, %s67
      %s69 = sphi 0, %s67
      %s70 = sphi 0, %s69
      %s84 = sphi 0, %s70
      %s88 = sphi 0, %s88
      %s90 = sphi 0, %s88
      %s91 = sphi 0, %s90
      %s105 = sphi 0, %s91
      %s109 = sphi 0, %s109
      %s111 = sphi 0, %s109
      %s112 = sphi 0, %s111
      %s126 = sphi 0, %s112
      %s132 = sphi 0, %s134
      %s135 = sphi 0, %s132
      %s136 = sphi 0, %s135
      %s152 = sphi 0, %s136
    $region4: #{dqn_forward.1} parent=1 // loop_header_branch
      %15 = sbr.rel (%p13) target = $region8
    $region5: #{dqn_forward.1} parent=1 // loop_body
      %s17 = ssub.s32 %s12, 1
      %s18 = ssub.s32 %s12, 2
      %s19 = sadd.s32 %s12, 1
      %s20 = ssub.s32 %s12, %s19
      %p21 = scmp.eq.s32.totalorder %s20, 0
      %s23 = sadd.s32 %s22, 1
      %s24 = scalar_select %p21, %s22, %s23
      %p27 = pneg %p21
      %p28 = scmp.eq.s32.totalorder %s12, 1
      %p29 = por %p27, %p28
      %p30 = scmp.ne.s32.totalorder %s22, %s25
      %p31 = scmp.eq.s32.totalorder %s12, 0
      %p32 = por %p30, %p31
      %p33 = scmp.ne.s32.totalorder %s22, %s25
      %p34 = scmp.eq.s32.totalorder %s17, 1
      %p35 = por %p33, %p34
      %p36 = scmp.ne.s32.totalorder %s25, %s26
      %p37 = scmp.eq.s32.totalorder %s17, 0
      %p38 = por %p36, %p37
      %p39 = scmp.ne.s32.totalorder %s25, %s26
      %p40 = scmp.eq.s32.totalorder %s18, 1
      %p41 = por %p39, %p40
      %p43 = scmp.ne.s32.totalorder %s26, %s42
      %p44 = scmp.eq.s32.totalorder %s18, 0
      %p45 = por %p43, %p44
      %s47 = sadd.s32 %s46, 1
      %p50 = scmp.eq.s32.totalorder %s12, 1
      %p51 = scmp.ne.s32.totalorder %s46, %s48
      %p52 = scmp.eq.s32.totalorder %s12, 0
      %p53 = por %p51, %p52
      %p54 = scmp.ne.s32.totalorder %s46, %s48
      %p55 = scmp.eq.s32.totalorder %s17, 1
      %p56 = por %p54, %p55
      %p57 = scmp.ne.s32.totalorder %s48, %s49
      %p58 = scmp.eq.s32.totalorder %s17, 0
      %p59 = por %p57, %p58
      %p60 = scmp.ne.s32.totalorder %s48, %s49
      %p61 = scmp.eq.s32.totalorder %s18, 1
      %p62 = por %p60, %p61
      %p64 = scmp.ne.s32.totalorder %s49, %s63
      %p65 = scmp.eq.s32.totalorder %s18, 0
      %p66 = por %p64, %p65
      %s68 = sadd.s32 %s67, 1
      %p71 = scmp.eq.s32.totalorder %s12, 1
      %p72 = scmp.ne.s32.totalorder %s67, %s69
      %p73 = scmp.eq.s32.totalorder %s12, 0
      %p74 = por %p72, %p73
      %p75 = scmp.ne.s32.totalorder %s67, %s69
      %p76 = scmp.eq.s32.totalorder %s17, 1
      %p77 = por %p75, %p76
      %p78 = scmp.ne.s32.totalorder %s69, %s70
      %p79 = scmp.eq.s32.totalorder %s17, 0
      %p80 = por %p78, %p79
      %p81 = scmp.ne.s32.totalorder %s69, %s70
      %p82 = scmp.eq.s32.totalorder %s18, 1
      %p83 = por %p81, %p82
      %p85 = scmp.ne.s32.totalorder %s70, %s84
      %p86 = scmp.eq.s32.totalorder %s18, 0
      %p87 = por %p85, %p86
      %s89 = sadd.s32 %s88, 1
      %p92 = scmp.eq.s32.totalorder %s12, 1
      %p93 = scmp.ne.s32.totalorder %s88, %s90
      %p94 = scmp.eq.s32.totalorder %s12, 0
      %p95 = por %p93, %p94
      %p96 = scmp.ne.s32.totalorder %s88, %s90
      %p97 = scmp.eq.s32.totalorder %s17, 1
      %p98 = por %p96, %p97
      %p99 = scmp.ne.s32.totalorder %s90, %s91
      %p100 = scmp.eq.s32.totalorder %s17, 0
      %p101 = por %p99, %p100
      %p102 = scmp.ne.s32.totalorder %s90, %s91
      %p103 = scmp.eq.s32.totalorder %s18, 1
      %p104 = por %p102, %p103
      %p106 = scmp.ne.s32.totalorder %s91, %s105
      %p107 = scmp.eq.s32.totalorder %s18, 0
      %p108 = por %p106, %p107
      %s110 = sadd.s32 %s109, 1
      %p113 = scmp.eq.s32.totalorder %s12, 1
      %p114 = scmp.ne.s32.totalorder %s109, %s111
      %p115 = scmp.eq.s32.totalorder %s12, 0
      %p116 = por %p114, %p115
      %p117 = scmp.ne.s32.totalorder %s109, %s111
      %p118 = scmp.eq.s32.totalorder %s17, 1
      %p119 = por %p117, %p118
      %p120 = scmp.ne.s32.totalorder %s111, %s112
      %p121 = scmp.eq.s32.totalorder %s17, 0
      %p122 = por %p120, %p121
      %p123 = scmp.ne.s32.totalorder %s111, %s112
      %p124 = scmp.eq.s32.totalorder %s18, 1
      %p125 = por %p123, %p124
      %p127 = scmp.ne.s32.totalorder %s112, %s126
      %p128 = scmp.eq.s32.totalorder %s18, 0
      %p129 = por %p127, %p128
      %s130 = ssub.s32 %s12, %s19
      %p131 = scmp.eq.s32.totalorder %s130, 0
      %s133 = sadd.s32 %s132, 1
      %s134 = scalar_select %p131, %s132, %s133
      %p137 = pneg %p131
      %p138 = scmp.eq.s32.totalorder %s12, 1
      %p139 = por %p137, %p138
      %p140 = scmp.ne.s32.totalorder %s132, %s135
      %p141 = scmp.eq.s32.totalorder %s12, 0
      %p142 = por %p140, %p141
      %p143 = scmp.ne.s32.totalorder %s132, %s135
      %p144 = scmp.eq.s32.totalorder %s17, 1
      %p145 = por %p143, %p144
      %p146 = scmp.ne.s32.totalorder %s135, %s136
      %p147 = scmp.eq.s32.totalorder %s17, 0
      %p148 = por %p146, %p147
      %p149 = scmp.ne.s32.totalorder %s135, %s136
      %p150 = scmp.eq.s32.totalorder %s18, 1
      %p151 = por %p149, %p150
      %p153 = scmp.ne.s32.totalorder %s136, %s152
      %p154 = scmp.eq.s32.totalorder %s18, 0
      %p155 = por %p153, %p154
      %p156 = scmp.le.s32.totalorder 1, %s12
      %p157 = scmp.lt.s32.totalorder %s12, 3
      %p158 = pnand %p156, %p157
      %p159 = pneg %p158
      // Predicated region
      $region9: #{dqn_forward.1} parent=5 // pred_check
        _
      $region10: #{dqn_forward.1} parent=5 // pred_check_branch
        %161 = sbr.rel (%p158) target = $region12
      $region11: #{dqn_forward.1} parent=5 // pred_region
        %s162 = ssub.s32 %s12, 1
        // Predicated region
        $region13: #{dqn_forward.1} parent=11 // pred_check
          %p163 = pneg %p59
        $region14: #{dqn_forward.1} parent=11 // pred_check_branch
          %165 = sbr.rel (%p163) target = $region16
        $region15: #{dqn_forward.1} parent=11 // pred_region
          _
        $region16: #{dqn_forward.1} parent=11 // pred_fallthru
          _
        // Predicated region
        $region17: #{dqn_forward.1} parent=11 // pred_check
          %p166 = pneg %p80
        $region18: #{dqn_forward.1} parent=11 // pred_check_branch
          %168 = sbr.rel (%p166) target = $region20
        $region19: #{dqn_forward.1} parent=11 // pred_region
          _
        $region20: #{dqn_forward.1} parent=11 // pred_fallthru
          _
        // Predicated region
        $region21: #{dqn_forward.1} parent=11 // pred_check
          %p169 = pneg %p101
        $region22: #{dqn_forward.1} parent=11 // pred_check_branch
          %171 = sbr.rel (%p169) target = $region24
        $region23: #{dqn_forward.1} parent=11 // pred_region
          %s173 = ssub.s32 2048, 2048
          %174 = vsyncadd [#allocation3], %s173
          %s175 = sshll.u32 [#allocation2], 4
          %s176 = int_to_ptr.vmem [resolvable:$true] %s175
          %181 = dma.hbm_to_vmem [thread:$0]  %s3, 2048, %s176, [#allocation3], 128, 128, 8
        $region24: #{dqn_forward.1} parent=11 // pred_fallthru
          _
        // Predicated region
        $region25: #{dqn_forward.1} parent=11 // pred_check
          %p182 = pneg %p122
        $region26: #{dqn_forward.1} parent=11 // pred_check_branch
          %184 = sbr.rel (%p182) target = $region28
        $region27: #{dqn_forward.1} parent=11 // pred_region
          _
        $region28: #{dqn_forward.1} parent=11 // pred_fallthru
          _
      $region12: #{dqn_forward.1} parent=5 // pred_fallthru
        _
      %p185 = scmp.lt.s32.totalorder %s12, 2
      // Predicated region
      $region29: #{dqn_forward.1} parent=5 // pred_check
        %p186 = pneg %p185
      $region30: #{dqn_forward.1} parent=5 // pred_check_branch
        %188 = sbr.rel (%p186) target = $region32
      $region31: #{dqn_forward.1} parent=5 // pred_region
        // Predicated region
        $region33: #{dqn_forward.1} parent=31 // pred_check
          %p189 = pneg %p32
        $region34: #{dqn_forward.1} parent=31 // pred_check_branch
          %191 = sbr.rel (%p189) target = $region36
        $region35: #{dqn_forward.1} parent=31 // pred_region
          %s192 = smul.u32 2, %s12
          %p193 = scmp.lt.s32.totalorder %s192, 3
          %s194 = scalar_select %p193, %s192, 3
          %s195 = smul.addr %s194, 8
          %s196 = scalar_lea.vmem %s0, %s195
          %s197 = smul.u32 2, %s12
        $region36: #{dqn_forward.1} parent=31 // pred_fallthru
          _
      $region32: #{dqn_forward.1} parent=5 // pred_fallthru
        _
      %p198 = scmp.le.s32.totalorder 1, %s12
      %p199 = scmp.lt.s32.totalorder %s12, 3
      %p200 = pnand %p198, %p199
      %p201 = pneg %p200
      // Predicated region
      $region37: #{dqn_forward.1} parent=5 // pred_check
        _
      $region38: #{dqn_forward.1} parent=5 // pred_check_branch
        %203 = sbr.rel (%p200) target = $region40
      $region39: #{dqn_forward.1} parent=5 // pred_region
        %s204 = ssub.s32 %s12, 1
        // Predicated region
        $region41: #{dqn_forward.1} parent=39 // pred_check
          %p205 = pneg %p101
        $region42: #{dqn_forward.1} parent=39 // pred_check_branch
          %207 = sbr.rel (%p205) target = $region44
        $region43: #{dqn_forward.1} parent=39 // pred_region
          %208 = dma.done [#allocation3], 2048
        $region44: #{dqn_forward.1} parent=39 // pred_fallthru
          _
        %s209 = smul.u32 2, %s17
        %p210 = scmp.lt.s32.totalorder %s209, 3
        %s211 = scalar_select %p210, %s209, 3
        %s212 = smul.addr %s211, 8
        %s213 = scalar_lea.vmem %s0, %s212
        %p214 = pneg %p38
        %p215 = pneg %p35
        %p216 = pneg %p59
        %p217 = pneg %p56
        %p218 = pneg %p80
        %p219 = pneg %p77
        %p220 = pneg %p101
        %p221 = pneg %p98
        %p222 = pneg %p122
        %p223 = pneg %p119
        %p224 = pneg %p148
        %p225 = pneg %p145
        %s226 = smul.u32 2, %s17
        %p227 = scmp.lt.s32.totalorder %s226, 3
        %s228 = scalar_select %p227, %s226, 3
        %s229 = smul.addr %s228, 8
        %s230 = scalar_lea.vmem %s5, %s229
        %s231 = smul.u32 2, %s17
        %p232 = scmp.lt.s32.totalorder %s231, 3
        %s233 = scalar_select %p232, %s231, 3
        %s234 = smul.addr %s233, 8
        %s235 = scalar_lea.vmem %s0, %s234
        %s236 = smul.u32 2, %s17
        %s237 = smul.u32 2, %s17
        %p238 = scmp.lt.s32.totalorder %s237, 3
        %s239 = scalar_select %p238, %s237, 3
        %s240 = smul.addr %s239, 8
        %s241 = scalar_lea.vmem %s5, %s240
        %s242 = smul.u32 2, %s17
        %v243 = vld [vmem:[%s235] sm:$0xff]
        %v244 = vld [vmem:[%s235 + $0x8] sm:$0xff]
        %v245 = vld [vmem:[%s1] sm:$0xff]
        %v246 = vld [vmem:[%s1 + $0x8] sm:$0x3]
        %v247 = vld [vmem:[%s2] sm:$0x1]
        %v249 = vlaneseq
        %v250 = vshrl.u32 %v249, 7
        %v251 = vsub.s32 0, %v250
        %v252 = vrot.slane %v247, %v251
        %vm254 = vcmask 80896
        %v256 = vsel %vm254, %v243, 0
        %v259 = vsel %vm254, %v244, 0
        %vm261 = vcmask 1041408
        %v263 = vsel %vm261, %v246, 0
        %265 = vmatprep.subr.mxu0 0.0
        %266 = vmatpush1.msra.mxu0 %v245
        %267 = vmatprep.subr.mxu0 0.0
        %268 = vmatpush1.msra.mxu0 %v263
        %269 = vmatprep.subr.mxu0 0.0
        %270 = vmatpush1.msra.mxu0 0.0
        %271 = vmatprep.subr.mxu0 0.0
        %272 = vmatpush1.msra.mxu0 0.0
        %273 = vmatprep.subr.mxu0 0.0
        %274 = vmatpush1.msra.mxu0 0.0
        %275 = vmatprep.subr.mxu0 0.0
        %276 = vmatpush1.msra.mxu0 0.0
        %277 = vmatprep.subr.mxu0 0.0
        %278 = vmatpush1.msra.mxu0 0.0
        %279 = vmatprep.subr.mxu0 0.0
        %280 = vmatpush1.msra.mxu0 0.0
        %281 = vmatprep.subr.mxu0 0.0
        %282 = vmatpush1.msra.mxu0 0.0
        %283 = vmatprep.subr.mxu0 0.0
        %284 = vmatpush1.msra.mxu0 0.0
        %285 = vmatprep.subr.mxu0 0.0
        %286 = vmatpush1.msra.mxu0 0.0
        %287 = vmatprep.subr.mxu0 0.0
        %288 = vmatpush1.msra.mxu0 0.0
        %289 = vmatprep.subr.mxu0 0.0
        %290 = vmatpush1.msra.mxu0 0.0
        %291 = vmatprep.subr.mxu0 0.0
        %292 = vmatpush1.msra.mxu0 0.0
        %293 = vmatprep.subr.mxu0 0.0
        %294 = vmatpush1.msra.mxu0 0.0
        %295 = vmatprep.subr.mxu0 0.0
        %296 = vmatpush1.msra.mxu0 0.0
        %297 = vmatprep.subr.mxu0 0.0
        %298 = vmatpush1.msra.mxu0 0.0
        %299 = vmatprep.subr.mxu0 0.0
        %300 = vmatpush1.msra.mxu0 0.0
        %301 = vmatprep.subr.mxu0 0.0
        %302 = vmatpush1.msra.mxu0 0.0
        %303 = vmatprep.subr.mxu0 0.0
        %304 = vmatpush1.msra.mxu0 0.0
        %305 = vmatprep.subr.mxu0 0.0
        %306 = vmatpush1.msra.mxu0 0.0
        %307 = vmatprep.subr.mxu0 0.0
        %308 = vmatpush1.msra.mxu0 0.0
        %309 = vmatprep.subr.mxu0 0.0
        %310 = vmatpush1.msra.mxu0 0.0
        %311 = vmatprep.subr.mxu0 0.0
        %312 = vmatpush1.msra.mxu0 0.0
        %313 = vmatprep.subr.mxu0 0.0
        %314 = vmatpush1.msra.mxu0 0.0
        %315 = vmatprep.subr.mxu0 0.0
        %316 = vmatpush1.msra.mxu0 0.0
        %317 = vmatprep.subr.mxu0 0.0
        %318 = vmatpush1.msra.mxu0 0.0
        %319 = vmatprep.subr.mxu0 0.0
        %320 = vmatpush1.msra.mxu0 0.0
        %321 = vmatprep.subr.mxu0 0.0
        %322 = vmatpush1.msra.mxu0 0.0
        %323 = vmatprep.subr.mxu0 0.0
        %324 = vmatpush1.msra.mxu0 0.0
        %325 = vmatprep.subr.mxu0 0.0
        %326 = vmatpush1.msra.mxu0 0.0
        %327 = vmatprep.subr.mxu0 0.0
        %328 = vmatpush1.msra.mxu0 0.0
        %329 = vmatprep.mubr.f32.mxu0 0.0
        %330 = vmatmul.mubr.f32.gmra.mrb[0].mxu0 %v256
        %v331 = vpop.f32.mrb[0].mxu0
        %v332 = vadd.f32 %v252, %v331
        %v333 = vpop.f32.mrb[0].mxu0
        %334 = vmatprep.mubr.f32.mxu0 0.0
        %335 = vmatmul.mubr.f32.gmra.mrb[0].mxu0 %v259
        %v336 = vpop.f32.mrb[0].mxu0
        %v337 = vadd.f32 %v252, %v336
        %v338 = vpop.f32.mrb[0].mxu0
        %339 = vdwg.mxu0
        %v340 = vmax.f32 %v332, 0.0
        %v341 = vmax.f32 %v337, 0.0
        %v342 = vld [vmem:[#allocation2] sm:$0xff]
        %v343 = vld [vmem:[#allocation2 + $0x8] sm:$0xff]
        %v344 = vld [vmem:[#allocation2 + $0x10] sm:$0xff]
        %v345 = vld [vmem:[#allocation2 + $0x18] sm:$0xff]
        %v346 = vld [vmem:[#allocation2 + $0x20] sm:$0xff]
        %v347 = vld [vmem:[#allocation2 + $0x28] sm:$0xff]
        %v348 = vld [vmem:[#allocation2 + $0x30] sm:$0xff]
        %v349 = vld [vmem:[#allocation2 + $0x38] sm:$0xff]
        %v350 = vld [vmem:[#allocation2 + $0x40] sm:$0xff]
        %v351 = vld [vmem:[#allocation2 + $0x48] sm:$0xff]
        %v352 = vld [vmem:[#allocation2 + $0x50] sm:$0xff]
        %v353 = vld [vmem:[#allocation2 + $0x58] sm:$0xff]
        %v354 = vld [vmem:[#allocation2 + $0x60] sm:$0xff]
        %v355 = vld [vmem:[#allocation2 + $0x68] sm:$0xff]
        %v356 = vld [vmem:[#allocation2 + $0x70] sm:$0xff]
        %v357 = vld [vmem:[#allocation2 + $0x78] sm:$0xff]
        %v358 = vld [vmem:[%s4] sm:$0x1]
        %v360 = vlaneseq
        %v361 = vshrl.u32 %v360, 7
        %v362 = vsub.s32 0, %v361
        %v363 = vrot.slane %v358, %v362
        %365 = vmatprep.subr.mxu0 0.0
        %366 = vmatpush1.msra.mxu0 %v342
        %367 = vmatprep.subr.mxu0 0.0
        %368 = vmatpush1.msra.mxu0 %v343
        %369 = vmatprep.subr.mxu0 0.0
        %370 = vmatpush1.msra.mxu0 %v344
        %371 = vmatprep.subr.mxu0 0.0
        %372 = vmatpush1.msra.mxu0 %v345
        %373 = vmatprep.subr.mxu0 0.0
        %374 = vmatpush1.msra.mxu0 %v346
        %375 = vmatprep.subr.mxu0 0.0
        %376 = vmatpush1.msra.mxu0 %v347
        %377 = vmatprep.subr.mxu0 0.0
        %378 = vmatpush1.msra.mxu0 %v348
        %379 = vmatprep.subr.mxu0 0.0
        %380 = vmatpush1.msra.mxu0 %v349
        %381 = vmatprep.subr.mxu0 0.0
        %382 = vmatpush1.msra.mxu0 %v350
        %383 = vmatprep.subr.mxu0 0.0
        %384 = vmatpush1.msra.mxu0 %v351
        %385 = vmatprep.subr.mxu0 0.0
        %386 = vmatpush1.msra.mxu0 %v352
        %387 = vmatprep.subr.mxu0 0.0
        %388 = vmatpush1.msra.mxu0 %v353
        %389 = vmatprep.subr.mxu0 0.0
        %390 = vmatpush1.msra.mxu0 %v354
        %391 = vmatprep.subr.mxu0 0.0
        %392 = vmatpush1.msra.mxu0 %v355
        %393 = vmatprep.subr.mxu0 0.0
        %394 = vmatpush1.msra.mxu0 %v356
        %395 = vmatprep.subr.mxu0 0.0
        %396 = vmatpush1.msra.mxu0 %v357
        %397 = vmatprep.subr.mxu0 0.0
        %398 = vmatpush1.msra.mxu0 0.0
        %399 = vmatprep.subr.mxu0 0.0
        %400 = vmatpush1.msra.mxu0 0.0
        %401 = vmatprep.subr.mxu0 0.0
        %402 = vmatpush1.msra.mxu0 0.0
        %403 = vmatprep.subr.mxu0 0.0
        %404 = vmatpush1.msra.mxu0 0.0
        %405 = vmatprep.subr.mxu0 0.0
        %406 = vmatpush1.msra.mxu0 0.0
        %407 = vmatprep.subr.mxu0 0.0
        %408 = vmatpush1.msra.mxu0 0.0
        %409 = vmatprep.subr.mxu0 0.0
        %410 = vmatpush1.msra.mxu0 0.0
        %411 = vmatprep.subr.mxu0 0.0
        %412 = vmatpush1.msra.mxu0 0.0
        %413 = vmatprep.subr.mxu0 0.0
        %414 = vmatpush1.msra.mxu0 0.0
        %415 = vmatprep.subr.mxu0 0.0
        %416 = vmatpush1.msra.mxu0 0.0
        %417 = vmatprep.subr.mxu0 0.0
        %418 = vmatpush1.msra.mxu0 0.0
        %419 = vmatprep.subr.mxu0 0.0
        %420 = vmatpush1.msra.mxu0 0.0
        %421 = vmatprep.subr.mxu0 0.0
        %422 = vmatpush1.msra.mxu0 0.0
        %423 = vmatprep.subr.mxu0 0.0
        %424 = vmatpush1.msra.mxu0 0.0
        %425 = vmatprep.subr.mxu0 0.0
        %426 = vmatpush1.msra.mxu0 0.0
        %427 = vmatprep.subr.mxu0 0.0
        %428 = vmatpush1.msra.mxu0 0.0
        %429 = vmatprep.mubr.f32.mxu0 0.0
        %430 = vmatmul.mubr.f32.gmra.mrb[0].mxu0 %v340
        %v431 = vpop.f32.mrb[0].mxu0
        %v432 = vadd.f32 %v363, %v431
        %v433 = vpop.f32.mrb[0].mxu0
        %434 = vmatprep.mubr.f32.mxu0 0.0
        %435 = vmatmul.mubr.f32.gmra.mrb[0].mxu0 %v341
        %v436 = vpop.f32.mrb[0].mxu0
        %v437 = vadd.f32 %v363, %v436
        %v438 = vpop.f32.mrb[0].mxu0
        %439 = vdwg.mxu0
        %440 = vst [vmem:[%s241] sm:$0xff] %v432
        %441 = vst [vmem:[%s241 + $0x8] sm:$0xff] %v437
        %s442 = smul.u32 2, %s17
        %p443 = scmp.lt.s32.totalorder %s442, 3
        %s444 = scalar_select %p443, %s442, 3
        %s445 = smul.addr %s444, 8
        %s446 = scalar_lea.vmem %s5, %s445
        // Predicated region
        $region45: #{dqn_forward.1} parent=39 // pred_check
          %p447 = pneg %p145
        $region46: #{dqn_forward.1} parent=39 // pred_check_branch
          %449 = sbr.rel (%p447) target = $region48
        $region47: #{dqn_forward.1} parent=39 // pred_region
          %s450 = smul.u32 2, %s17
        $region48: #{dqn_forward.1} parent=39 // pred_fallthru
          _
      $region40: #{dqn_forward.1} parent=5 // pred_fallthru
        _
      %p451 = scmp.le.s32.totalorder 2, %s12
      // Predicated region
      $region49: #{dqn_forward.1} parent=5 // pred_check
        %p452 = pneg %p451
      $region50: #{dqn_forward.1} parent=5 // pred_check_branch
        %454 = sbr.rel (%p452) target = $region52
      $region51: #{dqn_forward.1} parent=5 // pred_region
        %s455 = ssub.s32 %s12, 2
        // Predicated region
        $region53: #{dqn_forward.1} parent=51 // pred_check
          %p456 = pneg %p151
        $region54: #{dqn_forward.1} parent=51 // pred_check_branch
          %458 = sbr.rel (%p456) target = $region56
        $region55: #{dqn_forward.1} parent=51 // pred_region
          %s459 = smul.u32 2, %s18
          %p460 = scmp.lt.s32.totalorder %s459, 3
          %s461 = scalar_select %p460, %s459, 3
          %s462 = smul.addr %s461, 8
          %s463 = scalar_lea.vmem %s5, %s462
        $region56: #{dqn_forward.1} parent=51 // pred_fallthru
          _
      $region52: #{dqn_forward.1} parent=5 // pred_fallthru
        _
    $region6: #{dqn_forward.1} parent=1 // loop_footer
      %s16 = sadd.s32 1, %s12
    $region7: #{dqn_forward.1} parent=1 // loop_footer_branch
      %11 = sbr.rel target = $region3
    $region8: #{dqn_forward.1} parent=1 // loop_exit
      _
    %464 = vsyncpa [#allocation3], 1
    %s465 = scalar_lea.sflag [#allocation3], 1
    %466 = vsyncpa %s465, 1

</llo_original>
